<compile_context>
chip_gen: v5e
topology: v5e:2x2
jax: 0.10.0
libtpu: 0.0.40
codegen_flags: <defaults>
</compile_context>

<pallas_src>
import functools

import jax
import jax.numpy as jnp
from jax.experimental import pallas as pl
from jax.experimental.pallas import tpu as pltpu

_BN_EPS = 1e-5


def _round_up(x, m):
    return (x + m - 1) // m * m


def _vmem_budget_bytes():
    """Generation-aware (tile-picker budget, scoped-vmem limit) in bytes."""
    try:
        cap = int(pltpu.get_tpu_info().vmem_capacity_bytes)
    except Exception:
        cap = 64 * 1024 * 1024            # conservative: v7x per-TC size
    budget = (cap * 3) // 4               # ~96 MiB on v5e/v6e, ~48 MiB on v7x
    limit = min(cap - (4 << 20), budget + (8 << 20))
    return budget, limit


def _pick_row_tile(nm, cin, cout, w_bytes, budget):
    """Largest row tile whose per-step working set fits the VMEM budget.

    Counts: double-buffered f32 x tile, double-buffered f32 out tile
    (Phase 2 is the binding phase), in-kernel bf16 copy of the x tile plus an
    f32 h temporary, and the bf16 weight assumed double-buffered.
    """
    def need(tm):
        return (2 * tm * cin * 4 + 2 * tm * cout * 4
                + tm * cin * 2 + tm * cout * 4
                + 2 * w_bytes + (2 << 20))

    tm = 2048                              # halving keeps multiples of 256
    while tm > 64 and need(tm) > budget:   # (v6e/v7x 256x256 MXU friendly)
        tm //= 2
    # NOTE: for very large Cin*Cout the weight alone can exceed the budget;
    # that regime would need an additional Cout/Cin grid axis (not needed
    # for the shapes exercised here).
    return max(16, min(tm, _round_up(nm, 16)))   # multiple of 16 (bf16 pack)


def _stats_kernel(x_ref, w_ref, b_ref, sum_ref, ssq_ref, *,
                  tm, tiles_per_split, nm_valid, ragged):
    # x_ref: (tm, Cin) f32   w_ref: (Cin, Cout) bf16   b_ref: (1, Cout) f32
    # sum_ref / ssq_ref: (1, 1, Cout) resident accumulators (one per split).
    i = pl.program_id(1)

    @pl.when(i == 0)
    def _():
        sum_ref[...] = jnp.zeros_like(sum_ref)
        ssq_ref[...] = jnp.zeros_like(ssq_ref)

    # bf16 operands -> native single-pass MXU rate; f32 accumulation.
    h = jnp.dot(x_ref[...].astype(jnp.bfloat16), w_ref[...],
                preferred_element_type=jnp.float32)
    h = jnp.maximum(h + b_ref[...], 0.0)

    if ragged:
        # Rows past NM in the ragged last tile hold garbage; exclude them from
        # the statistics (jnp.where also kills NaN garbage, unlike mask*mul).
        c = pl.program_id(0)
        row0 = (c * tiles_per_split + i) * tm
        rows = row0 + jax.lax.broadcasted_iota(jnp.int32, (tm, 1), 0)
        h = jnp.where(rows < nm_valid, h, 0.0)

    sum_ref[...] += jnp.sum(h, axis=0, keepdims=True)[None]
    ssq_ref[...] += jnp.sum(h * h, axis=0, keepdims=True)[None]


def _out_kernel(x_ref, w_ref, b_ref, scale_ref, shift_ref, o_ref):
    # Recompute h = relu(x @ W + b) and apply the folded BN FMA epilogue.
    h = jnp.dot(x_ref[...].astype(jnp.bfloat16), w_ref[...],
                preferred_element_type=jnp.float32)
    h = jnp.maximum(h + b_ref[...], 0.0)
    o_ref[...] = h * scale_ref[...] + shift_ref[...]


def dense_block(z, weight, bias, gamma, beta):
    """z: (N, M, Cin) f32; weight: (Cout, Cin); bias/gamma/beta: (Cout,)."""
    N, M, Cin = z.shape
    Cout = weight.shape[0]
    NM = N * M

    budget, vmem_limit = _vmem_budget_bytes()
    w_bytes = Cin * Cout * 2                    # bf16 weight
    tm = _pick_row_tile(NM, Cin, Cout, w_bytes, budget)
    num_tiles = pl.cdiv(NM, tm)
    ragged = (NM % tm) != 0

    # Split the Phase-1 reduction into independent resident accumulators so
    # v7x's two TensorCores can both work on it (no effect on v5e/v6e).
    nsplit = 2 if (num_tiles >= 2 and num_tiles % 2 == 0) else 1
    tiles_per_split = num_tiles // nsplit

    # Layout plumbing — no per-row copies of the activation: the flatten is a
    # free reshape; only the small per-feature params are cast / transposed.
    x2d = z.reshape(NM, Cin)
    w_t = weight.astype(jnp.bfloat16).T          # (Cin, Cout) bf16, MXU-ready
    b2d = bias.astype(jnp.float32).reshape(1, Cout)
    g2d = gamma.astype(jnp.float32).reshape(1, Cout)
    be2d = beta.astype(jnp.float32).reshape(1, Cout)

    # Phase 1: per-feature sum / sum-of-squares of h = relu(x @ W + b).
    sums, ssqs = pl.pallas_call(
        functools.partial(_stats_kernel, tm=tm,
                          tiles_per_split=tiles_per_split,
                          nm_valid=NM, ragged=ragged),
        out_shape=(
            jax.ShapeDtypeStruct((nsplit, 1, Cout), jnp.float32),
            jax.ShapeDtypeStruct((nsplit, 1, Cout), jnp.float32),
        ),
        grid=(nsplit, tiles_per_split),
        in_specs=[
            pl.BlockSpec((tm, Cin), lambda c, i: (c * tiles_per_split + i, 0)),
            pl.BlockSpec((Cin, Cout), lambda c, i: (0, 0)),
            pl.BlockSpec((1, Cout), lambda c, i: (0, 0)),
        ],
        out_specs=(
            pl.BlockSpec((1, 1, Cout), lambda c, i: (c, 0, 0)),
            pl.BlockSpec((1, 1, Cout), lambda c, i: (c, 0, 0)),
        ),
        compiler_params=pltpu.CompilerParams(
            dimension_semantics=("parallel", "arbitrary"),
            vmem_limit_bytes=vmem_limit),
    )(x2d, w_t, b2d)

    # O(Cout) per-feature math once: mean / biased variance folded into a
    # single scale & shift FMA for Phase 2.
    inv_n = 1.0 / float(NM)
    mean = jnp.sum(sums, axis=0) * inv_n                       # (1, Cout)
    var = jnp.maximum(jnp.sum(ssqs, axis=0) * inv_n - mean * mean, 0.0)
    scale = jax.lax.rsqrt(var + _BN_EPS) * g2d
    shift = be2d - mean * scale

    # Phase 2: recompute h and normalize (embarrassingly parallel row sweep).
    out = pl.pallas_call(
        _out_kernel,
        out_shape=jax.ShapeDtypeStruct((NM, Cout), jnp.float32),
        grid=(num_tiles,),
        in_specs=[
            pl.BlockSpec((tm, Cin), lambda i: (i, 0)),
            pl.BlockSpec((Cin, Cout), lambda i: (0, 0)),
            pl.BlockSpec((1, Cout), lambda i: (0, 0)),
            pl.BlockSpec((1, Cout), lambda i: (0, 0)),
            pl.BlockSpec((1, Cout), lambda i: (0, 0)),
        ],
        out_specs=pl.BlockSpec((tm, Cout), lambda i: (i, 0)),
        compiler_params=pltpu.CompilerParams(
            dimension_semantics=("parallel",),
            vmem_limit_bytes=vmem_limit),
    )(x2d, w_t, b2d, scale, shift)

    return out.reshape(N, M, Cout)


if __name__ == "__main__":
    # Small shapes consistent with the module's forward: Z is (N, M, Cin).
    N, M, Cin, Cout = 2, 8, 32, 32

    key = jax.random.PRNGKey(0)
    kz, kw, kb = jax.random.split(key, 3)

    z = jax.random.normal(kz, (N, M, Cin), dtype=jnp.float32)

    # PyTorch Linear default init: U(-1/sqrt(Cin), 1/sqrt(Cin)).
    bound = 1.0 / (Cin ** 0.5)
    weight = jax.random.uniform(kw, (Cout, Cin), jnp.float32, -bound, bound)
    bias = jax.random.uniform(kb, (Cout,), jnp.float32, -bound, bound)
    gamma = jnp.ones((Cout,), jnp.float32)   # BatchNorm1d affine weight
    beta = jnp.zeros((Cout,), jnp.float32)   # BatchNorm1d affine bias

    out = dense_block(z, weight, bias, gamma, beta)
    jax.block_until_ready(out)

    # Pure-JAX reference (training-mode BatchNorm1d).  The kernel runs the
    # matmul with bf16 operands + f32 accumulation, so the reference uses the
    # same bf16-rounded inputs; tolerance covers accumulation-order effects.
    z_bf = z.astype(jnp.bfloat16).astype(jnp.float32)
    w_bf = weight.astype(jnp.bfloat16).astype(jnp.float32)
    h_ref = jnp.maximum(z_bf.reshape(N * M, Cin) @ w_bf.T + bias, 0.0)
    mu = h_ref.mean(axis=0, keepdims=True)
    var = ((h_ref - mu) ** 2).mean(axis=0, keepdims=True)
    ref = ((h_ref - mu) / jnp.sqrt(var + _BN_EPS) * gamma + beta).reshape(
        N, M, Cout)
    assert jnp.allclose(out, ref, atol=2e-3, rtol=2e-3), float(
        jnp.max(jnp.abs(out - ref)))

    print("KERNEL_OK")
</pallas_src>

<mosaic_0001>
module attributes {stable_mosaic.version = 11 : i64} {
  func.func @_stats_kernel(%arg0: i32, %arg1: i32, %arg2: memref<16x32xf32, #tpu.memory_space<vmem>>, %arg3: memref<32x32xbf16, #tpu.memory_space<vmem>>, %arg4: memref<1x32xf32, #tpu.memory_space<vmem>>, %arg5: memref<1x1x32xf32, #tpu.memory_space<vmem>>, %arg6: memref<1x1x32xf32, #tpu.memory_space<vmem>>) attributes {dimension_semantics = [#tpu.dimension_semantics<parallel>, #tpu.dimension_semantics<arbitrary>], iteration_bounds = array<i64: 1, 1>, scalar_prefetch = 0 : i64, scratch_operands = 0 : i64, tpu.core_type = #tpu.core_type<tc>, window_params = [{transform_indices = @transform_0, window_bounds = array<i64: 16, 32>}, {pipeline_mode = #tpu.pipeline_mode<synchronous>, transform_indices = @transform_1, window_bounds = array<i64: 32, 32>}, {pipeline_mode = #tpu.pipeline_mode<synchronous>, transform_indices = @transform_2, window_bounds = array<i64: 1, 32>}, {transform_indices = @transform_3, window_bounds = array<i64: 1, 1, 32>}, {transform_indices = @transform_4, window_bounds = array<i64: 1, 1, 32>}]} {
    %c0_i32 = arith.constant 0 : i32
    %0 = arith.cmpi eq, %arg1, %c0_i32 : i32
    %1 = arith.extui %0 : i1 to i32
    %c0_i32_0 = arith.constant 0 : i32
    %2 = arith.cmpi ne, %1, %c0_i32_0 : i32
    scf.if %2 {
      %cst_21 = arith.constant 0.000000e+00 : f32
      %25 = vector.broadcast %cst_21 : f32 to vector<1x1x32xf32>
      %c0_22 = arith.constant 0 : index
      %c0_23 = arith.constant 0 : index
      %c0_24 = arith.constant 0 : index
      %26 = vector.load %arg5[%c0_22, %c0_23, %c0_24] : memref<1x1x32xf32, #tpu.memory_space<vmem>>, vector<1x1x32xf32>
      tpu.vector_store %arg5[%c0_22, %c0_23, %c0_24], %25 {strides = array<i32>} : memref<1x1x32xf32, #tpu.memory_space<vmem>>, vector<1x1x32xf32>,
      %cst_25 = arith.constant 0.000000e+00 : f32
      %27 = vector.broadcast %cst_25 : f32 to vector<1x1x32xf32>
      %c0_26 = arith.constant 0 : index
      %c0_27 = arith.constant 0 : index
      %c0_28 = arith.constant 0 : index
      %28 = vector.load %arg6[%c0_26, %c0_27, %c0_28] : memref<1x1x32xf32, #tpu.memory_space<vmem>>, vector<1x1x32xf32>
      tpu.vector_store %arg6[%c0_26, %c0_27, %c0_28], %27 {strides = array<i32>} : memref<1x1x32xf32, #tpu.memory_space<vmem>>, vector<1x1x32xf32>,
    } else {
    }
    %c0 = arith.constant 0 : index
    %c0_1 = arith.constant 0 : index
    %3 = vector.load %arg2[%c0, %c0_1] : memref<16x32xf32, #tpu.memory_space<vmem>>, vector<16x32xf32>
    %4 = arith.truncf %3 : vector<16x32xf32> to vector<16x32xbf16>
    %c0_2 = arith.constant 0 : index
    %c0_3 = arith.constant 0 : index
    %5 = vector.load %arg3[%c0_2, %c0_3] : memref<32x32xbf16, #tpu.memory_space<vmem>>, vector<32x32xbf16>
    %cst = arith.constant dense<0.000000e+00> : vector<16x32xf32>
    %6 = tpu.matmul %4, %5, %cst {dimension_numbers = #tpu.dot_dimension_numbers<[1], [0], [0], [1], [0, 0, 1, 1], [], []>} : vector<16x32xbf16>, vector<32x32xbf16>, vector<16x32xf32> -> vector<16x32xf32>
    %c0_4 = arith.constant 0 : index
    %c0_5 = arith.constant 0 : index
    %7 = vector.load %arg4[%c0_4, %c0_5] : memref<1x32xf32, #tpu.memory_space<vmem>>, vector<1x32xf32>
    %8 = vector.broadcast %7 : vector<1x32xf32> to vector<16x32xf32>
    %9 = arith.addf %6, %8 : vector<16x32xf32>
    %cst_6 = arith.constant 0.000000e+00 : f32
    %10 = vector.broadcast %cst_6 : f32 to vector<16x32xf32>
    %11 = arith.maximumf %9, %10 : vector<16x32xf32>
    %c0_7 = arith.constant 0 : index
    %c0_8 = arith.constant 0 : index
    %c0_9 = arith.constant 0 : index
    %12 = vector.load %arg5[%c0_7, %c0_8, %c0_9] : memref<1x1x32xf32, #tpu.memory_space<vmem>>, vector<1x1x32xf32>
    %cst_10 = arith.constant dense<0.000000e+00> : vector<32xf32>
    %13 = vector.multi_reduction <add>, %11, %cst_10 [0] : vector<16x32xf32> to vector<32xf32>
    %14 = vector.shape_cast %13 : vector<32xf32> to vector<1x32xf32>
    %15 = vector.shape_cast %14 : vector<1x32xf32> to vector<1x1x32xf32>
    %16 = arith.addf %12, %15 : vector<1x1x32xf32>
    %c0_11 = arith.constant 0 : index
    %c0_12 = arith.constant 0 : index
    %c0_13 = arith.constant 0 : index
    %17 = vector.load %arg5[%c0_11, %c0_12, %c0_13] : memref<1x1x32xf32, #tpu.memory_space<vmem>>, vector<1x1x32xf32>
    tpu.vector_store %arg5[%c0_11, %c0_12, %c0_13], %16 {strides = array<i32>} : memref<1x1x32xf32, #tpu.memory_space<vmem>>, vector<1x1x32xf32>,
    %c0_14 = arith.constant 0 : index
    %c0_15 = arith.constant 0 : index
    %c0_16 = arith.constant 0 : index
    %18 = vector.load %arg6[%c0_14, %c0_15, %c0_16] : memref<1x1x32xf32, #tpu.memory_space<vmem>>, vector<1x1x32xf32>
    %19 = arith.mulf %11, %11 : vector<16x32xf32>
    %cst_17 = arith.constant dense<0.000000e+00> : vector<32xf32>
    %20 = vector.multi_reduction <add>, %19, %cst_17 [0] : vector<16x32xf32> to vector<32xf32>
    %21 = vector.shape_cast %20 : vector<32xf32> to vector<1x32xf32>
    %22 = vector.shape_cast %21 : vector<1x32xf32> to vector<1x1x32xf32>
    %23 = arith.addf %18, %22 : vector<1x1x32xf32>
    %c0_18 = arith.constant 0 : index
    %c0_19 = arith.constant 0 : index
    %c0_20 = arith.constant 0 : index
    %24 = vector.load %arg6[%c0_18, %c0_19, %c0_20] : memref<1x1x32xf32, #tpu.memory_space<vmem>>, vector<1x1x32xf32>
    tpu.vector_store %arg6[%c0_18, %c0_19, %c0_20], %23 {strides = array<i32>} : memref<1x1x32xf32, #tpu.memory_space<vmem>>, vector<1x1x32xf32>,
    return
  }
  func.func @transform_0(%arg0: i32, %arg1: i32) -> (i32, i32) {
    %c1_i32 = arith.constant 1 : i32
    %0 = arith.muli %arg0, %c1_i32 : i32
    %1 = arith.addi %0, %arg1 : i32
    %c0_i32 = arith.constant 0 : i32
    %c0_i32_0 = arith.constant 0 : i32
    return %1, %c0_i32 : i32, i32
  }
  func.func @transform_1(%arg0: i32, %arg1: i32) -> (i32, i32) {
    %c0_i32 = arith.constant 0 : i32
    %c0_i32_0 = arith.constant 0 : i32
    %c0_i32_1 = arith.constant 0 : i32
    return %c0_i32, %c0_i32_0 : i32, i32
  }
  func.func @transform_2(%arg0: i32, %arg1: i32) -> (i32, i32) {
    %c0_i32 = arith.constant 0 : i32
    %c0_i32_0 = arith.constant 0 : i32
    %c0_i32_1 = arith.constant 0 : i32
    return %c0_i32, %c0_i32_0 : i32, i32
  }
  func.func @transform_3(%arg0: i32, %arg1: i32) -> (i32, i32, i32) {
    %c0_i32 = arith.constant 0 : i32
    %c0_i32_0 = arith.constant 0 : i32
    %c0_i32_1 = arith.constant 0 : i32
    return %arg0, %c0_i32, %c0_i32_0 : i32, i32, i32
  }
  func.func @transform_4(%arg0: i32, %arg1: i32) -> (i32, i32, i32) {
    %c0_i32 = arith.constant 0 : i32
    %c0_i32_0 = arith.constant 0 : i32
    %c0_i32_1 = arith.constant 0 : i32
    return %arg0, %c0_i32, %c0_i32_0 : i32, i32, i32
  }
}

</mosaic_0001>

<llo_original>
// kernel: tpu_custom_call.1
$region0: #{tpu_custom_call.1}
  #allocation0 [shape = 'u32[]', space=smem, size = 0x4, offset = 0x4, fixed_abs, tag = 'smem constant byte address 0x4 - core index']
  #allocation1 [shape = 'u32[72,128]{1,0:T(1,128)}', space=vmem, size = 0x9000, scoped, tag = 'internal scratch']
  %s0 = inlined_call_operand.hbm [shape: f32[16,32], index: 0, kind: input, shape index: {}]
  %s1 = inlined_call_operand.hbm [shape: bf16[32,32], index: 1, kind: input, shape index: {}]
  %s2 = inlined_call_operand.vmem [shape: f32[1,32], index: 2, kind: input, shape index: {}]
  %s3 = inlined_call_operand.hbm [shape: f32[1,1,32], index: 3, kind: output, shape index: {0}]
  %s4 = inlined_call_operand.hbm [shape: f32[1,1,32], index: 4, kind: output, shape index: {1}]
  %5 = xla_tuple %s3, %s4
  %s6 = sld [smem:[#allocation0]]
  $region42: #{tpu_custom_call.1} parent=0
    _
  %s8 = ssub.s32 1, %s6
  %s9 = scalar_select 0, %s8, %s6
  $region1: #{tpu_custom_call.1} parent=0
    #allocation2 [shape = 'u8[8192]{0}', space=vmem, size = 0x2000, scoped, tag = 'input window, operand 0, single buffered']
    #allocation3 [shape = 's32[1]{0}', space=sflag, size = 0x4, scoped, tag = 'scoped memory for tpu_custom_call.1']
    #allocation4 [shape = 's32[1]{0}', space=sflag, size = 0x4, scoped, tag = 'scoped memory for tpu_custom_call.1']
    #allocation5 [shape = 'u8[8192]{0}', space=vmem, size = 0x2000, scoped, tag = 'input window, operand 1, single buffered']
    #allocation6 [shape = 's32[1]{0}', space=sflag, size = 0x4, scoped, tag = 'scoped memory for tpu_custom_call.1']
    #allocation7 [shape = 'u8[512]{0}', space=vmem, size = 0x400, scoped, tag = 'output window, operand 0, single buffered']
    #allocation8 [shape = 'u8[512]{0}', space=vmem, size = 0x400, scoped, tag = 'output window, operand 1, single buffered']
    #allocation9 [shape = 's32[1]{0}', space=sflag, size = 0x4, scoped, tag = 'scoped memory for tpu_custom_call.1']
    %10 = vsyncpa [#allocation3], 0
    %11 = vsyncpa [#allocation6], 0
    %12 = vsyncpa [#allocation4], 0
    %13 = vsyncpa [#allocation9], 0
    // Predicated region
    $region2: #{tpu_custom_call.1} parent=1 // pred_check
      _
    $region3: #{tpu_custom_call.1} parent=1 // pred_check_branch
      %15 = sbr.rel (0) target = $region5
    $region4: #{tpu_custom_call.1} parent=1 // pred_region
      %s16 = sadd.s32 0, 0
      %s17 = smul.u32 2, %s16
      %19 = vsyncadd [#allocation3], 0
      %s20 = smul.addr %s17, 8
      %s21 = scalar_lea.hbm %s0, %s20
      %s22 = sshll.u32 %s21, 4
      %s23 = int_to_ptr.hbm [resolvable:$true] %s22
      %s24 = sshll.u32 [#allocation2], 4
      %s25 = int_to_ptr.vmem [resolvable:$true] %s24
      %30 = dma.hbm_to_vmem [thread:$0]  %s23, 256, %s25, [#allocation3], 128, 128, 8
    $region5: #{tpu_custom_call.1} parent=1 // pred_fallthru
      _
    // Predicated region
    $region6: #{tpu_custom_call.1} parent=1 // pred_check
      _
    $region7: #{tpu_custom_call.1} parent=1 // pred_check_branch
      %32 = sbr.rel (0) target = $region9
    $region8: #{tpu_custom_call.1} parent=1 // pred_region
      %34 = vsyncadd [#allocation6], 0
      %s35 = sshll.u32 %s1, 4
      %s36 = int_to_ptr.hbm [resolvable:$true] %s35
      %s37 = sshll.u32 [#allocation5], 4
      %s38 = int_to_ptr.vmem [resolvable:$true] %s37
      %43 = dma.hbm_to_vmem [thread:$0]  %s36, 256, %s38, [#allocation6], 64, 64, 4
    $region9: #{tpu_custom_call.1} parent=1 // pred_fallthru
      _
    // Predicated region
    $region10: #{tpu_custom_call.1} parent=1 // pred_check
      _
    $region11: #{tpu_custom_call.1} parent=1 // pred_check_branch
      %45 = sbr.rel (0) target = $region13
    $region12: #{tpu_custom_call.1} parent=1 // pred_region
      _
    $region13: #{tpu_custom_call.1} parent=1 // pred_fallthru
      _
    // Predicated region
    $region14: #{tpu_custom_call.1} parent=1 // pred_check
      _
    $region15: #{tpu_custom_call.1} parent=1 // pred_check_branch
      %47 = sbr.rel (0) target = $region17
    $region16: #{tpu_custom_call.1} parent=1 // pred_region
      %49 = dma.done [#allocation3], 256
    $region17: #{tpu_custom_call.1} parent=1 // pred_fallthru
      _
    // Predicated region
    $region18: #{tpu_custom_call.1} parent=1 // pred_check
      _
    $region19: #{tpu_custom_call.1} parent=1 // pred_check_branch
      %51 = sbr.rel (0) target = $region21
    $region20: #{tpu_custom_call.1} parent=1 // pred_region
      %53 = dma.done [#allocation6], 256
    $region21: #{tpu_custom_call.1} parent=1 // pred_fallthru
      _
    %s54 = sadd.s32 0, 0
    %s55 = smul.u32 2, %s54
    %p57 = scmp.eq.s32.totalorder 0, 0
    // Predicated region
    $region22: #{tpu_custom_call.1} parent=1 // pred_check
      %p58 = pneg %p57
    $region23: #{tpu_custom_call.1} parent=1 // pred_check_branch
      %60 = sbr.rel (%p58) target = $region25
    $region24: #{tpu_custom_call.1} parent=1 // pred_region
      %vm61 = vcmask 253952
      %62 = vst.msk [vmem:[#allocation7] sm:$0x1] %vm61, 0.0
      %63 = vst.msk [vmem:[#allocation8] sm:$0x1] %vm61, 0.0
    $region25: #{tpu_custom_call.1} parent=1 // pred_fallthru
      _
    %v64 = vld [vmem:[#allocation2] sm:$0xff]
    %v65 = vld [vmem:[#allocation2 + $0x8] sm:$0xff]
    %v66 = vpack.c.bf16 %v65, %v64
    %v67 = vld [vmem:[#allocation5] sm:$0xf]
    %v68 = vld [vmem:[#allocation5 + $0x4] sm:$0xf]
    %v69 = vld [vmem:[#allocation5 + $0x8] sm:$0xf]
    %v70 = vld [vmem:[#allocation5 + $0xc] sm:$0xf]
    %v71 = vld [vmem:[%s2] sm:$0x1]
    %v73 = vperm.slane %v71, 0
    %v79 = vunpack.c.l.b16 %v67
    %v80 = vunpack.c.l.b16 %v68
    %v81 = vunpack.c.l.b16 %v69
    %v82 = vunpack.c.l.b16 %v70
    %v83 = vpack.c.b16 %v80, %v79
    %v84 = vpack.c.b16 %v82, %v81
    %vm87 = vcmask 261120
    %v89 = vsel %vm87, %v66, 0
    %91 = vmatpush.bf16.msra.mxu0 0
    %92 = vmatpush.bf16.msra.mxu0 0
    %93 = vmatpush.bf16.msra.mxu0 0
    %94 = vmatpush.bf16.msra.mxu0 0
    %95 = vmatpush.bf16.msra.mxu0 0
    %96 = vmatpush.bf16.msra.mxu0 0
    %97 = vmatpush.bf16.msra.mxu0 %v84
    %98 = vmatpush.bf16.msra.mxu0 %v83
    %99 = vmatmul.bf16.gmra.mxu0 %v89
    %v100 = vpop.f32.mrf.mxu0
    %v101 = vadd.f32 %v73, %v100
    %v102 = vpop.f32.mrf.mxu0
    %v103 = vadd.f32 %v73, %v102
    %104 = vdwg.mxu0
    %v105 = vmax.f32 %v101, 0.0
    %v106 = vmax.f32 %v103, 0.0
    %v107 = vld [vmem:[#allocation7] sm:$0x1]
    %v108 = vsel %vm87, %v105, 0.0
    %v109 = vsel %vm87, %v106, 0.0
    %v110 = vadd.f32 %v108, %v109
    %v111 = vrot.slane %v110, 4
    %v112 = vadd.f32 %v110, %v111
    %v113 = vrot.slane %v112, 2
    %v114 = vadd.f32 %v112, %v113
    %v115 = vrot.slane %v114, 1
    %v116 = vadd.f32 %v114, %v115
    %v117 = vadd.f32 %v107, %v116
    %vm118 = vcmask 253952
    %119 = vst.msk [vmem:[#allocation7] sm:$0x1] %vm118, %v117
    %v120 = vld [vmem:[#allocation8] sm:$0x1]
    %v121 = vmul.f32 %v105, %v105
    %v122 = vmul.f32 %v106, %v106
    %v123 = vsel %vm87, %v121, 0.0
    %v124 = vsel %vm87, %v122, 0.0
    %v125 = vadd.f32 %v123, %v124
    %v126 = vrot.slane %v125, 4
    %v127 = vadd.f32 %v125, %v126
    %v128 = vrot.slane %v127, 2
    %v129 = vadd.f32 %v127, %v128
    %v130 = vrot.slane %v129, 1
    %v131 = vadd.f32 %v129, %v130
    %v132 = vadd.f32 %v120, %v131
    %133 = vst.msk [vmem:[#allocation8] sm:$0x1] %vm118, %v132
    // Predicated region
    $region26: #{tpu_custom_call.1} parent=1 // pred_check
      _
    $region27: #{tpu_custom_call.1} parent=1 // pred_check_branch
      %135 = sbr.rel (0) target = $region29
    $region28: #{tpu_custom_call.1} parent=1 // pred_region
      %137 = vsyncadd [#allocation4], 0
      %s139 = sshll.u32 [#allocation7], 4
      %s140 = int_to_ptr.vmem [resolvable:$true] %s139
      %s141 = sshll.u32 %s3, 4
      %s142 = int_to_ptr.hbm [resolvable:$true] %s141
      %144 = dma.vmem_to_hbm [thread:$0]  %s140, 16, %s142, [#allocation4]
    $region29: #{tpu_custom_call.1} parent=1 // pred_fallthru
      _
    // Predicated region
    $region30: #{tpu_custom_call.1} parent=1 // pred_check
      _
    $region31: #{tpu_custom_call.1} parent=1 // pred_check_branch
      %146 = sbr.rel (0) target = $region33
    $region32: #{tpu_custom_call.1} parent=1 // pred_region
      %148 = vsyncadd [#allocation9], 0
      %s150 = sshll.u32 [#allocation8], 4
      %s151 = int_to_ptr.vmem [resolvable:$true] %s150
      %s152 = sshll.u32 %s4, 4
      %s153 = int_to_ptr.hbm [resolvable:$true] %s152
      %155 = dma.vmem_to_hbm [thread:$0]  %s151, 16, %s153, [#allocation9]
    $region33: #{tpu_custom_call.1} parent=1 // pred_fallthru
      _
    // Predicated region
    $region34: #{tpu_custom_call.1} parent=1 // pred_check
      _
    $region35: #{tpu_custom_call.1} parent=1 // pred_check_branch
      %157 = sbr.rel (0) target = $region37
    $region36: #{tpu_custom_call.1} parent=1 // pred_region
      %159 = dma.done [#allocation4], 16
    $region37: #{tpu_custom_call.1} parent=1 // pred_fallthru
      _
    // Predicated region
    $region38: #{tpu_custom_call.1} parent=1 // pred_check
      _
    $region39: #{tpu_custom_call.1} parent=1 // pred_check_branch
      %161 = sbr.rel (0) target = $region41
    $region40: #{tpu_custom_call.1} parent=1 // pred_region
      %163 = dma.done [#allocation9], 16
    $region41: #{tpu_custom_call.1} parent=1 // pred_fallthru
      _
    %164 = vsyncpa [#allocation3], 1
    %165 = vsyncpa [#allocation6], 1
    %166 = vsyncpa [#allocation4], 1
    %167 = vsyncpa [#allocation9], 1

</llo_original>
